<compile_context>
chip_gen: v7x
topology: tpu7x:2x2x1
jax: 0.10.0
libtpu: 0.0.40
codegen_flags: <defaults>
</compile_context>

<pallas_src>
import functools
import math

import jax
import jax.numpy as jnp
from jax import lax
from jax.experimental import pallas as pl
from jax.experimental.pallas import tpu as pltpu

LN2 = math.log(2.0)

ACC_ROWS = 32    # accumulator height: 4x more independent VALU add chains than 8
NUM_CORES = 2    # leading "parallel" axis; v7x has 2 TCs, harmless on v5e/v6e

# accumulator slot indices inside the (5, ACC_ROWS, 128) per-core partial block
_LY, _LZ, _LYC, _AUX2, _SSE = range(5)


def _rd_partials_kernel(y_ref, z_ref, ycca_ref, yaux_ref, xhat_ref, tgt_ref,
                        out_ref, *, meta, steps_per_core):
    c = pl.program_id(0)            # core slice (parallel)
    s = pl.program_id(1)            # step within the slice (reduction)
    g = c * steps_per_core + s      # global block step

    # ---- init the per-core partial-sum block at the start of each slice ----
    @pl.when(s == 0)
    def _init():
        out_ref[...] = jnp.zeros_like(out_ref)

    def _accum(idx, x):
        """Fold per-lane partial sums of x (R,128) into out_ref[idx] (32,128)."""
        r = x.shape[0]
        if r % ACC_ROWS == 0:
            out_ref[idx] += x.reshape(r // ACC_ROWS, ACC_ROWS, 128).sum(axis=0)
        elif r % 8 == 0:
            out_ref[idx, 0:8, :] += x.reshape(r // 8, 8, 128).sum(axis=0)
        else:  # tiny single-block inputs: one-off sublane reduction
            out_ref[idx, 0:1, :] += jnp.sum(x, axis=0, keepdims=True)

    def _in_window(off, nblk):
        if off == 0:
            return g < nblk
        return jnp.logical_and(g >= off, g < off + nblk)

    def _branch(m, do_full, do_tail):
        rows, tile_rows, nb, off = m
        ragged = (rows % tile_rows) != 0
        if not ragged:
            @pl.when(_in_window(off, nb))
            def _():
                do_full()
            return
        # Ragged last block: unmasked fast path on all full blocks, masked
        # epilogue only on the very last block (no iota/select on hot steps).
        if nb > 1:
            @pl.when(_in_window(off, nb - 1))
            def _():
                do_full()
        valid = rows - (nb - 1) * tile_rows

        @pl.when(g == off + nb - 1)
        def _():
            row = lax.broadcasted_iota(jnp.int32, (tile_rows, 128), 0)
            do_tail(row < valid)

    # ---- likelihoods['y'] : sum(log y) ----
    def _y_full():
        _accum(_LY, jnp.log(y_ref[...].astype(jnp.float32)))

    def _y_tail(m):
        _accum(_LY, jnp.where(m, jnp.log(y_ref[...].astype(jnp.float32)), 0.0))

    _branch(meta['y'], _y_full, _y_tail)

    # ---- likelihoods['z'] : sum(log z) ----
    def _z_full():
        _accum(_LZ, jnp.log(z_ref[...].astype(jnp.float32)))

    def _z_tail(m):
        _accum(_LZ, jnp.where(m, jnp.log(z_ref[...].astype(jnp.float32)), 0.0))

    _branch(meta['z'], _z_full, _z_tail)

    # ---- aux_likelihoods : sum(log y_cca) and sum(y_cca * log y_aux) ----
    def _aux_full():
        ycca = ycca_ref[...].astype(jnp.float32)
        yaux = yaux_ref[...].astype(jnp.float32)
        _accum(_LYC, jnp.log(ycca))
        _accum(_AUX2, ycca * jnp.log(yaux))

    def _aux_tail(m):
        ycca = ycca_ref[...].astype(jnp.float32)
        yaux = yaux_ref[...].astype(jnp.float32)
        _accum(_LYC, jnp.where(m, jnp.log(ycca), 0.0))
        _accum(_AUX2, jnp.where(m, ycca * jnp.log(yaux), 0.0))

    _branch(meta['aux'], _aux_full, _aux_tail)

    # ---- MSE : sum((x_hat - target)^2) ----
    def _mse_full():
        d = xhat_ref[...].astype(jnp.float32) - tgt_ref[...].astype(jnp.float32)
        _accum(_SSE, d * d)

    def _mse_tail(m):
        d = xhat_ref[...].astype(jnp.float32) - tgt_ref[...].astype(jnp.float32)
        _accum(_SSE, jnp.where(m, d * d, 0.0))

    _branch(meta['x'], _mse_full, _mse_tail)
    # TODO(synk): ms-ssim branch (type != 'mse') not implemented — multi-scale
    # SSIM has no clean single-kernel Pallas equivalent here.


def _rows_view(x, neutral):
    """(any shape) -> (rows, 128) lane-dense view.

    Fast path (element count % 128 == 0, the usual case for conv feature
    maps): a free reshape — no HBM copy, no dtype change.
    """
    flat = jnp.ravel(x)
    n = flat.shape[0]
    rem = (-n) % 128
    if rem:
        # TODO(synk): this concatenate costs one extra HBM read+write of the
        # tensor when size % 128 != 0; an XLA prefix-slice is a copy too, so
        # a truly copy-free path would need manual DMA from the 4-D tensor.
        flat = jnp.concatenate([flat, jnp.full((rem,), neutral, flat.dtype)])
    return flat.reshape(-1, 128)


def _tile_cap_and_vmem_limit():
    """Generation-aware row-tile cap and explicit scoped-VMEM limit."""
    try:
        vmem_bytes = int(pltpu.get_tpu_info().vmem_capacity_bytes)
    except Exception:
        vmem_bytes = 64 * 1024 * 1024            # conservative: v7x per-TC
    if vmem_bytes >= 100 * 1024 * 1024:          # v5e / v6e: 128 MiB physical
        # 8192 rows x 128 lanes x 4B = 4 MiB/buffer; 6 inputs double-buffered
        # -> ~48 MiB worst case, comfortably under a 96 MiB scoped limit.
        return 8192, 96 * 1024 * 1024
    # v7x: 64 MiB per TensorCore -> 2 MiB buffers (~24 MiB pipelined).
    return 4096, 48 * 1024 * 1024


def _block_meta(arr2d, cap):
    rows = arr2d.shape[0]
    tile_rows = rows if rows <= cap else cap     # block never exceeds the array
    n_blocks = pl.cdiv(rows, tile_rows)
    return rows, tile_rows, n_blocks


def _in_spec(m, steps_per_core):
    rows, tile_rows, nb, off = m
    if nb == 1 and off == 0:
        return pl.BlockSpec((tile_rows, 128), lambda c, s: (0, 0))

    def idx(c, s, _spc=steps_per_core, _off=off, _last=nb - 1):
        # Clamp outside this input's window: the block index stops changing,
        # so Pallas skips the re-fetch (no wasted HBM traffic).
        g = c * _spc + s - _off
        return (jnp.minimum(jnp.maximum(g, 0), _last), 0)

    return pl.BlockSpec((tile_rows, 128), idx)


def rate_distortion_loss(output, target, *, lmbda=0.01, beta=1.0, alpha=1.0,
                         tile_rows_cap=None):
    """Pallas implementation of RateDistortionLoss.forward (type='mse')."""
    N, _, H, W = target.shape
    num_pixels = float(N * H * W)
    num_mse_elems = float(target.size)

    x_hat = output['x_hat']
    y_lik = output['likelihoods']['y']
    z_lik = output['likelihoods']['z']
    y_cca = output['aux_likelihoods']['y_cca']
    y_aux = output['aux_likelihoods']['y_aux']

    assert x_hat.shape == target.shape
    assert y_cca.size == y_aux.size, "aux2 term is elementwise"

    cap, vmem_limit = _tile_cap_and_vmem_limit()
    if tile_rows_cap is not None:
        cap = int(tile_rows_cap)
    assert ACC_ROWS % 8 == 0 and cap % ACC_ROWS == 0

    # Lane-dense views; inputs stay in their native dtype (upcast in-kernel).
    y2d = _rows_view(y_lik, 1.0)      # log(1) = 0  -> neutral pad
    z2d = _rows_view(z_lik, 1.0)
    c2d = _rows_view(y_cca, 1.0)
    a2d = _rows_view(y_aux, 1.0)
    x2d = _rows_view(x_hat, 0.0)      # diff = 0    -> neutral pad
    t2d = _rows_view(target, 0.0)

    m_y = _block_meta(y2d, cap)
    m_z = _block_meta(z2d, cap)
    m_c = _block_meta(c2d, cap)       # y_aux shares this (equal size asserted)
    m_x = _block_meta(x2d, cap)       # target shares this (equal shape asserted)

    nb_max = max(m_y[2], m_z[2], m_c[2], m_x[2])
    # EUP smoothing: shift the z / aux log() windows onto later (MSE-only,
    # HBM-bound) steps, never extending the grid.
    off_z = max(0, min(m_y[2], nb_max - m_z[2]))
    off_aux = max(0, min(m_y[2], nb_max - m_c[2]))

    meta = {
        'y': (*m_y, 0),
        'z': (*m_z, off_z),
        'aux': (*m_c, off_aux),
        'x': (*m_x, 0),
    }

    steps_per_core = pl.cdiv(nb_max, NUM_CORES)
    grid = (NUM_CORES, steps_per_core)

    kernel = functools.partial(_rd_partials_kernel, meta=meta,
                               steps_per_core=steps_per_core)

    spec_y = _in_spec(meta['y'], steps_per_core)
    spec_z = _in_spec(meta['z'], steps_per_core)
    spec_aux = _in_spec(meta['aux'], steps_per_core)
    spec_x = _in_spec(meta['x'], steps_per_core)

    inputs = (y2d, z2d, c2d, a2d, x2d, t2d)
    total_bytes = sum(int(a.size) * a.dtype.itemsize for a in inputs)
    total_elems = sum(int(a.size) for a in inputs)
    n_logs = int(y2d.size + z2d.size + c2d.size + a2d.size)

    partials = pl.pallas_call(
        kernel,
        out_shape=jax.ShapeDtypeStruct((NUM_CORES, 5, ACC_ROWS, 128),
                                       jnp.float32),
        grid_spec=pltpu.PrefetchScalarGridSpec(
            num_scalar_prefetch=0,
            grid=grid,
            in_specs=[spec_y, spec_z, spec_aux, spec_aux, spec_x, spec_x],
            out_specs=pl.BlockSpec((None, 5, ACC_ROWS, 128),
                                   lambda c, s: (c, 0, 0, 0)),
        ),
        compiler_params=pltpu.CompilerParams(
            dimension_semantics=("parallel", "arbitrary"),
            vmem_limit_bytes=vmem_limit),
        cost_estimate=pl.CostEstimate(
            flops=3 * total_elems,
            transcendentals=n_logs,
            bytes_accessed=total_bytes + NUM_CORES * 5 * ACC_ROWS * 128 * 4),
    )(*inputs)

    # Combine the per-core per-lane partial sums (tiny) and finalize scalars.
    sums = jnp.sum(partials, axis=(0, 2, 3))
    sum_log_y, sum_log_z = sums[_LY], sums[_LZ]
    sum_log_ycca, aux2_num, sse = sums[_LYC], sums[_AUX2], sums[_SSE]

    inv = 1.0 / (LN2 * num_pixels)
    cca_loss = (sum_log_ycca - sum_log_y) * inv
    aux2_loss = -aux2_num * inv
    bpp_loss = -(sum_log_y + sum_log_z) * inv
    mse_loss = sse / num_mse_elems
    loss = (lmbda * (255.0 ** 2) * mse_loss
            + beta * bpp_loss + alpha * cca_loss + aux2_loss)

    return {'cca_loss': cca_loss, 'aux2_loss': aux2_loss, 'bpp_loss': bpp_loss,
            'mse_loss': mse_loss, 'loss': loss}


def _reference(output, target, *, lmbda=0.01, beta=1.0, alpha=1.0):
    """Pure-JAX reference mirroring the PyTorch forward (type='mse')."""
    N, _, H, W = target.shape
    num_pixels = N * H * W
    y = output['likelihoods']['y'].astype(jnp.float32)
    z = output['likelihoods']['z'].astype(jnp.float32)
    ycca = output['aux_likelihoods']['y_cca'].astype(jnp.float32)
    yaux = output['aux_likelihoods']['y_aux'].astype(jnp.float32)
    xhat = output['x_hat'].astype(jnp.float32)
    tgt = target.astype(jnp.float32)

    cca = (jnp.sum(jnp.log(y)) / -LN2 - jnp.sum(jnp.log(ycca)) / -LN2) / num_pixels
    aux2 = jnp.sum(ycca * jnp.log(yaux)) / (-LN2 * num_pixels)
    bpp = (jnp.sum(jnp.log(y)) + jnp.sum(jnp.log(z))) / (-LN2 * num_pixels)
    mse = jnp.mean((xhat - tgt) ** 2)
    loss = lmbda * 255 ** 2 * mse + beta * bpp + alpha * cca + aux2
    return {'cca_loss': cca, 'aux2_loss': aux2, 'bpp_loss': bpp,
            'mse_loss': mse, 'loss': loss}


if __name__ == "__main__":
    key = jax.random.PRNGKey(0)

    def make_case(case_key, img_shape, y_shape, z_shape):
        k1, k2, k3, k4, k5, k6 = jax.random.split(case_key, 6)
        target = jax.random.uniform(k1, img_shape, jnp.float32, 0.0, 1.0)
        x_hat = jnp.clip(
            target + 0.05 * jax.random.normal(k2, img_shape, jnp.float32),
            0.0, 1.0)
        # likelihoods are probabilities in (0, 1]
        y_lik = jax.random.uniform(k3, y_shape, jnp.float32, 0.05, 1.0)
        z_lik = jax.random.uniform(k4, z_shape, jnp.float32, 0.05, 1.0)
        y_cca = jax.random.uniform(k5, y_shape, jnp.float32, 0.05, 1.0)
        y_aux = jax.random.uniform(k6, y_shape, jnp.float32, 0.05, 1.0)
        out = {'x_hat': x_hat,
               'likelihoods': {'y': y_lik, 'z': z_lik},
               'aux_likelihoods': {'y_cca': y_cca, 'y_aux': y_aux}}
        return out, target

    cases = [
        # (img_shape, y_shape, z_shape, tile_rows_cap override)
        # Small case: single block per input, generation-default tiles.
        ((2, 3, 16, 16), (2, 8, 8, 8), (2, 4, 4, 4), None),
        # Medium case, generation-default tiles (single-block fast path).
        ((2, 4, 256, 192), (2, 32, 16, 12), (2, 8, 8, 6), None),
        # Forced small tiles: multi-block MSE with ragged last block,
        # staggered z/aux windows, two-slice ("megacore") split exercised.
        ((2, 4, 256, 192), (2, 32, 16, 12), (2, 8, 8, 6), 288),
        # Forced small tiles with ragged multi-block likelihood/aux tensors.
        ((2, 4, 256, 192), (2, 96, 8, 8), (2, 8, 8, 6), 64),
    ]

    for idx, (img_s, y_s, z_s, cap) in enumerate(cases):
        key, sub = jax.random.split(key)
        output, target = make_case(sub, img_s, y_s, z_s)

        out = rate_distortion_loss(output, target, lmbda=0.01, beta=1.0,
                                   alpha=1.0, tile_rows_cap=cap)
        out = jax.tree_util.tree_map(jax.block_until_ready, out)

        ref = _reference(output, target, lmbda=0.01, beta=1.0, alpha=1.0)
        for name in ('cca_loss', 'aux2_loss', 'bpp_loss', 'mse_loss', 'loss'):
            assert jnp.allclose(out[name], ref[name], rtol=1e-4, atol=1e-4), (
                idx, name, out[name], ref[name])

    print("KERNEL_OK")
</pallas_src>

<mosaic_0001>
module attributes {stable_mosaic.version = 11 : i64} {
  func.func @_rd_partials_kernel(%arg0: i32, %arg1: i32, %arg2: memref<8x128xf32, #tpu.memory_space<vmem>>, %arg3: memref<1x128xf32, #tpu.memory_space<vmem>>, %arg4: memref<8x128xf32, #tpu.memory_space<vmem>>, %arg5: memref<8x128xf32, #tpu.memory_space<vmem>>, %arg6: memref<12x128xf32, #tpu.memory_space<vmem>>, %arg7: memref<12x128xf32, #tpu.memory_space<vmem>>, %arg8: memref<1x5x32x128xf32, #tpu.memory_space<vmem>>) attributes {dimension_semantics = [#tpu.dimension_semantics<parallel>, #tpu.dimension_semantics<arbitrary>], iteration_bounds = array<i64: 2, 1>, scalar_prefetch = 0 : i64, scratch_operands = 0 : i64, tpu.core_type = #tpu.core_type<tc>, window_params = [{pipeline_mode = #tpu.pipeline_mode<synchronous>, transform_indices = @transform_0, window_bounds = array<i64: 8, 128>}, {pipeline_mode = #tpu.pipeline_mode<synchronous>, transform_indices = @transform_1, window_bounds = array<i64: 1, 128>}, {pipeline_mode = #tpu.pipeline_mode<synchronous>, transform_indices = @transform_2, window_bounds = array<i64: 8, 128>}, {pipeline_mode = #tpu.pipeline_mode<synchronous>, transform_indices = @transform_3, window_bounds = array<i64: 8, 128>}, {pipeline_mode = #tpu.pipeline_mode<synchronous>, transform_indices = @transform_4, window_bounds = array<i64: 12, 128>}, {pipeline_mode = #tpu.pipeline_mode<synchronous>, transform_indices = @transform_5, window_bounds = array<i64: 12, 128>}, {transform_indices = @transform_6, window_bounds = array<i64: 1, 5, 32, 128>}]} {
    %c1_i32 = arith.constant 1 : i32
    %0 = arith.muli %arg0, %c1_i32 : i32
    %1 = arith.addi %0, %arg1 : i32
    %c0_i32 = arith.constant 0 : i32
    %2 = arith.cmpi eq, %arg1, %c0_i32 : i32
    %3 = arith.extui %2 : i1 to i32
    %c0_i32_0 = arith.constant 0 : i32
    %4 = arith.cmpi ne, %3, %c0_i32_0 : i32
    scf.if %4 {
      %cst = arith.constant 0.000000e+00 : f32
      %17 = vector.broadcast %cst : f32 to vector<5x32x128xf32>
      %c0 = arith.constant 0 : index
      %c0_9 = arith.constant 0 : index
      %c0_10 = arith.constant 0 : index
      %c0_11 = arith.constant 0 : index
      %18 = vector.load %arg8[%c0, %c0_9, %c0_10, %c0_11] : memref<1x5x32x128xf32, #tpu.memory_space<vmem>>, vector<1x5x32x128xf32>
      %19 = vector.shape_cast %18 : vector<1x5x32x128xf32> to vector<5x32x128xf32>
      %20 = vector.shape_cast %17 : vector<5x32x128xf32> to vector<1x5x32x128xf32>
      tpu.vector_store %arg8[%c0, %c0_9, %c0_10, %c0_11], %20 {strides = array<i32>} : memref<1x5x32x128xf32, #tpu.memory_space<vmem>>, vector<1x5x32x128xf32>,
    } else {
    }
    %c1_i32_1 = arith.constant 1 : i32
    %5 = arith.cmpi slt, %1, %c1_i32_1 : i32
    %6 = arith.extui %5 : i1 to i32
    %c0_i32_2 = arith.constant 0 : i32
    %7 = arith.cmpi ne, %6, %c0_i32_2 : i32
    scf.if %7 {
      %c0 = arith.constant 0 : index
      %c0_9 = arith.constant 0 : index
      %17 = vector.load %arg2[%c0, %c0_9] : memref<8x128xf32, #tpu.memory_space<vmem>>, vector<8x128xf32>
      %18 = math.log %17 : vector<8x128xf32>
      %c0_10 = arith.constant 0 : index
      %c0_11 = arith.constant 0 : index
      %c0_12 = arith.constant 0 : index
      %c0_13 = arith.constant 0 : index
      %19 = vector.load %arg8[%c0_10, %c0_11, %c0_12, %c0_13] : memref<1x5x32x128xf32, #tpu.memory_space<vmem>>, vector<1x1x8x128xf32>
      %20 = vector.shape_cast %19 : vector<1x1x8x128xf32> to vector<8x128xf32>
      %21 = vector.shape_cast %18 : vector<8x128xf32> to vector<1x8x128xf32>
      %cst = arith.constant dense<0.000000e+00> : vector<8x128xf32>
      %22 = vector.multi_reduction <add>, %21, %cst [0] : vector<1x8x128xf32> to vector<8x128xf32>
      %23 = arith.addf %20, %22 : vector<8x128xf32>
      %c0_14 = arith.constant 0 : index
      %c0_15 = arith.constant 0 : index
      %c0_16 = arith.constant 0 : index
      %c0_17 = arith.constant 0 : index
      %24 = vector.load %arg8[%c0_14, %c0_15, %c0_16, %c0_17] : memref<1x5x32x128xf32, #tpu.memory_space<vmem>>, vector<1x1x8x128xf32>
      %25 = vector.shape_cast %24 : vector<1x1x8x128xf32> to vector<8x128xf32>
      %26 = vector.shape_cast %23 : vector<8x128xf32> to vector<1x1x8x128xf32>
      tpu.vector_store %arg8[%c0_14, %c0_15, %c0_16, %c0_17], %26 {strides = array<i32>} : memref<1x5x32x128xf32, #tpu.memory_space<vmem>>, vector<1x1x8x128xf32>,
    } else {
    }
    %c1_i32_3 = arith.constant 1 : i32
    %8 = arith.cmpi slt, %1, %c1_i32_3 : i32
    %9 = arith.extui %8 : i1 to i32
    %c0_i32_4 = arith.constant 0 : i32
    %10 = arith.cmpi ne, %9, %c0_i32_4 : i32
    scf.if %10 {
      %c0 = arith.constant 0 : index
      %c0_9 = arith.constant 0 : index
      %17 = vector.load %arg3[%c0, %c0_9] : memref<1x128xf32, #tpu.memory_space<vmem>>, vector<1x128xf32>
      %18 = math.log %17 : vector<1x128xf32>
      %c0_10 = arith.constant 0 : index
      %c1 = arith.constant 1 : index
      %c0_11 = arith.constant 0 : index
      %c0_12 = arith.constant 0 : index
      %19 = vector.load %arg8[%c0_10, %c1, %c0_11, %c0_12] : memref<1x5x32x128xf32, #tpu.memory_space<vmem>>, vector<1x1x1x128xf32>
      %20 = vector.shape_cast %19 : vector<1x1x1x128xf32> to vector<1x128xf32>
      %cst = arith.constant dense<0.000000e+00> : vector<128xf32>
      %21 = vector.multi_reduction <add>, %18, %cst [0] : vector<1x128xf32> to vector<128xf32>
      %22 = vector.shape_cast %21 : vector<128xf32> to vector<1x128xf32>
      %23 = arith.addf %20, %22 : vector<1x128xf32>
      %c0_13 = arith.constant 0 : index
      %c1_14 = arith.constant 1 : index
      %c0_15 = arith.constant 0 : index
      %c0_16 = arith.constant 0 : index
      %24 = vector.load %arg8[%c0_13, %c1_14, %c0_15, %c0_16] : memref<1x5x32x128xf32, #tpu.memory_space<vmem>>, vector<1x1x1x128xf32>
      %25 = vector.shape_cast %24 : vector<1x1x1x128xf32> to vector<1x128xf32>
      %26 = vector.shape_cast %23 : vector<1x128xf32> to vector<1x1x1x128xf32>
      tpu.vector_store %arg8[%c0_13, %c1_14, %c0_15, %c0_16], %26 {strides = array<i32>} : memref<1x5x32x128xf32, #tpu.memory_space<vmem>>, vector<1x1x1x128xf32>,
    } else {
    }
    %c1_i32_5 = arith.constant 1 : i32
    %11 = arith.cmpi slt, %1, %c1_i32_5 : i32
    %12 = arith.extui %11 : i1 to i32
    %c0_i32_6 = arith.constant 0 : i32
    %13 = arith.cmpi ne, %12, %c0_i32_6 : i32
    scf.if %13 {
      %c0 = arith.constant 0 : index
      %c0_9 = arith.constant 0 : index
      %17 = vector.load %arg4[%c0, %c0_9] : memref<8x128xf32, #tpu.memory_space<vmem>>, vector<8x128xf32>
      %c0_10 = arith.constant 0 : index
      %c0_11 = arith.constant 0 : index
      %18 = vector.load %arg5[%c0_10, %c0_11] : memref<8x128xf32, #tpu.memory_space<vmem>>, vector<8x128xf32>
      %19 = math.log %17 : vector<8x128xf32>
      %c0_12 = arith.constant 0 : index
      %c2 = arith.constant 2 : index
      %c0_13 = arith.constant 0 : index
      %c0_14 = arith.constant 0 : index
      %20 = vector.load %arg8[%c0_12, %c2, %c0_13, %c0_14] : memref<1x5x32x128xf32, #tpu.memory_space<vmem>>, vector<1x1x8x128xf32>
      %21 = vector.shape_cast %20 : vector<1x1x8x128xf32> to vector<8x128xf32>
      %22 = vector.shape_cast %19 : vector<8x128xf32> to vector<1x8x128xf32>
      %cst = arith.constant dense<0.000000e+00> : vector<8x128xf32>
      %23 = vector.multi_reduction <add>, %22, %cst [0] : vector<1x8x128xf32> to vector<8x128xf32>
      %24 = arith.addf %21, %23 : vector<8x128xf32>
      %c0_15 = arith.constant 0 : index
      %c2_16 = arith.constant 2 : index
      %c0_17 = arith.constant 0 : index
      %c0_18 = arith.constant 0 : index
      %25 = vector.load %arg8[%c0_15, %c2_16, %c0_17, %c0_18] : memref<1x5x32x128xf32, #tpu.memory_space<vmem>>, vector<1x1x8x128xf32>
      %26 = vector.shape_cast %25 : vector<1x1x8x128xf32> to vector<8x128xf32>
      %27 = vector.shape_cast %24 : vector<8x128xf32> to vector<1x1x8x128xf32>
      tpu.vector_store %arg8[%c0_15, %c2_16, %c0_17, %c0_18], %27 {strides = array<i32>} : memref<1x5x32x128xf32, #tpu.memory_space<vmem>>, vector<1x1x8x128xf32>,
      %28 = math.log %18 : vector<8x128xf32>
      %29 = arith.mulf %17, %28 : vector<8x128xf32>
      %c0_19 = arith.constant 0 : index
      %c3 = arith.constant 3 : index
      %c0_20 = arith.constant 0 : index
      %c0_21 = arith.constant 0 : index
      %30 = vector.load %arg8[%c0_19, %c3, %c0_20, %c0_21] : memref<1x5x32x128xf32, #tpu.memory_space<vmem>>, vector<1x1x8x128xf32>
      %31 = vector.shape_cast %30 : vector<1x1x8x128xf32> to vector<8x128xf32>
      %32 = vector.shape_cast %29 : vector<8x128xf32> to vector<1x8x128xf32>
      %cst_22 = arith.constant dense<0.000000e+00> : vector<8x128xf32>
      %33 = vector.multi_reduction <add>, %32, %cst_22 [0] : vector<1x8x128xf32> to vector<8x128xf32>
      %34 = arith.addf %31, %33 : vector<8x128xf32>
      %c0_23 = arith.constant 0 : index
      %c3_24 = arith.constant 3 : index
      %c0_25 = arith.constant 0 : index
      %c0_26 = arith.constant 0 : index
      %35 = vector.load %arg8[%c0_23, %c3_24, %c0_25, %c0_26] : memref<1x5x32x128xf32, #tpu.memory_space<vmem>>, vector<1x1x8x128xf32>
      %36 = vector.shape_cast %35 : vector<1x1x8x128xf32> to vector<8x128xf32>
      %37 = vector.shape_cast %34 : vector<8x128xf32> to vector<1x1x8x128xf32>
      tpu.vector_store %arg8[%c0_23, %c3_24, %c0_25, %c0_26], %37 {strides = array<i32>} : memref<1x5x32x128xf32, #tpu.memory_space<vmem>>, vector<1x1x8x128xf32>,
    } else {
    }
    %c1_i32_7 = arith.constant 1 : i32
    %14 = arith.cmpi slt, %1, %c1_i32_7 : i32
    %15 = arith.extui %14 : i1 to i32
    %c0_i32_8 = arith.constant 0 : i32
    %16 = arith.cmpi ne, %15, %c0_i32_8 : i32
    scf.if %16 {
      %c0 = arith.constant 0 : index
      %c0_9 = arith.constant 0 : index
      %17 = vector.load %arg6[%c0, %c0_9] : memref<12x128xf32, #tpu.memory_space<vmem>>, vector<12x128xf32>
      %c0_10 = arith.constant 0 : index
      %c0_11 = arith.constant 0 : index
      %18 = vector.load %arg7[%c0_10, %c0_11] : memref<12x128xf32, #tpu.memory_space<vmem>>, vector<12x128xf32>
      %19 = arith.subf %17, %18 : vector<12x128xf32>
      %20 = arith.mulf %19, %19 : vector<12x128xf32>
      %c0_12 = arith.constant 0 : index
      %c4 = arith.constant 4 : index
      %c0_13 = arith.constant 0 : index
      %c0_14 = arith.constant 0 : index
      %21 = vector.load %arg8[%c0_12, %c4, %c0_13, %c0_14] : memref<1x5x32x128xf32, #tpu.memory_space<vmem>>, vector<1x1x1x128xf32>
      %22 = vector.shape_cast %21 : vector<1x1x1x128xf32> to vector<1x128xf32>
      %cst = arith.constant dense<0.000000e+00> : vector<128xf32>
      %23 = vector.multi_reduction <add>, %20, %cst [0] : vector<12x128xf32> to vector<128xf32>
      %24 = vector.shape_cast %23 : vector<128xf32> to vector<1x128xf32>
      %25 = arith.addf %22, %24 : vector<1x128xf32>
      %c0_15 = arith.constant 0 : index
      %c4_16 = arith.constant 4 : index
      %c0_17 = arith.constant 0 : index
      %c0_18 = arith.constant 0 : index
      %26 = vector.load %arg8[%c0_15, %c4_16, %c0_17, %c0_18] : memref<1x5x32x128xf32, #tpu.memory_space<vmem>>, vector<1x1x1x128xf32>
      %27 = vector.shape_cast %26 : vector<1x1x1x128xf32> to vector<1x128xf32>
      %28 = vector.shape_cast %25 : vector<1x128xf32> to vector<1x1x1x128xf32>
      tpu.vector_store %arg8[%c0_15, %c4_16, %c0_17, %c0_18], %28 {strides = array<i32>} : memref<1x5x32x128xf32, #tpu.memory_space<vmem>>, vector<1x1x1x128xf32>,
    } else {
    }
    return
  }
  func.func @transform_0(%arg0: i32, %arg1: i32) -> (i32, i32) {
    %c0_i32 = arith.constant 0 : i32
    %c0_i32_0 = arith.constant 0 : i32
    %c0_i32_1 = arith.constant 0 : i32
    return %c0_i32, %c0_i32_0 : i32, i32
  }
  func.func @transform_1(%arg0: i32, %arg1: i32) -> (i32, i32) {
    %c0_i32 = arith.constant 0 : i32
    %c0_i32_0 = arith.constant 0 : i32
    %c0_i32_1 = arith.constant 0 : i32
    return %c0_i32, %c0_i32_0 : i32, i32
  }
  func.func @transform_2(%arg0: i32, %arg1: i32) -> (i32, i32) {
    %c0_i32 = arith.constant 0 : i32
    %c0_i32_0 = arith.constant 0 : i32
    %c0_i32_1 = arith.constant 0 : i32
    return %c0_i32, %c0_i32_0 : i32, i32
  }
  func.func @transform_3(%arg0: i32, %arg1: i32) -> (i32, i32) {
    %c0_i32 = arith.constant 0 : i32
    %c0_i32_0 = arith.constant 0 : i32
    %c0_i32_1 = arith.constant 0 : i32
    return %c0_i32, %c0_i32_0 : i32, i32
  }
  func.func @transform_4(%arg0: i32, %arg1: i32) -> (i32, i32) {
    %c0_i32 = arith.constant 0 : i32
    %c0_i32_0 = arith.constant 0 : i32
    %c0_i32_1 = arith.constant 0 : i32
    return %c0_i32, %c0_i32_0 : i32, i32
  }
  func.func @transform_5(%arg0: i32, %arg1: i32) -> (i32, i32) {
    %c0_i32 = arith.constant 0 : i32
    %c0_i32_0 = arith.constant 0 : i32
    %c0_i32_1 = arith.constant 0 : i32
    return %c0_i32, %c0_i32_0 : i32, i32
  }
  func.func @transform_6(%arg0: i32, %arg1: i32) -> (i32, i32, i32, i32) {
    %c0_i32 = arith.constant 0 : i32
    %c0_i32_0 = arith.constant 0 : i32
    %c0_i32_1 = arith.constant 0 : i32
    %c0_i32_2 = arith.constant 0 : i32
    return %arg0, %c0_i32, %c0_i32_0, %c0_i32_1 : i32, i32, i32, i32
  }
}

</mosaic_0001>

<llo_original>
// kernel: tpu_custom_call.1
$region0: #{tpu_custom_call.1}
  #allocation0 [shape = 'u32[]', space=smem, size = 0x4, offset = 0x4, fixed_abs, tag = 'smem constant byte address 0x4 - core index']
  #allocation1 [shape = 'u32[144,128]{1,0:T(1,128)}', space=vmem, size = 0x12000, scoped, tag = 'internal scratch']
  %s0 = inlined_call_operand.hbm [shape: f32[8,128], index: 0, kind: input, shape index: {}]
  %s1 = inlined_call_operand.vmem [shape: f32[1,128], index: 1, kind: input, shape index: {}]
  %s2 = inlined_call_operand.hbm [shape: f32[8,128], index: 2, kind: input, shape index: {}]
  %s3 = inlined_call_operand.hbm [shape: f32[8,128], index: 3, kind: input, shape index: {}]
  %s4 = inlined_call_operand.hbm [shape: f32[12,128], index: 4, kind: input, shape index: {}]
  %s5 = inlined_call_operand.vmem [shape: f32[12,128], index: 5, kind: input, shape index: {}]
  %s6 = inlined_call_operand.hbm [shape: f32[2,5,32,128], index: 6, kind: output, shape index: {}]
  %s7 = sld [smem:[#allocation0]]
  $region81: #{tpu_custom_call.1} parent=0
    _
  %s9 = ssub.s32 1, %s7
  %s10 = scalar_select 0, %s9, %s7
  $region1: #{tpu_custom_call.1} parent=0
    #allocation2 [shape = 'u8[4096]{0}', space=vmem, size = 0x1000, scoped, tag = 'input window, operand 0, single buffered']
    #allocation3 [shape = 's32[2]{0}', space=sflag, size = 0x8, scoped, tag = 'scoped memory for tpu_custom_call.1']
    #allocation4 [shape = 's32[2]{0}', space=sflag, size = 0x8, scoped, tag = 'scoped memory for tpu_custom_call.1']
    #allocation5 [shape = 'u8[4096]{0}', space=vmem, size = 0x1000, scoped, tag = 'input window, operand 2, single buffered']
    #allocation6 [shape = 's32[1]{0}', space=sflag, size = 0x4, scoped, tag = 'scoped memory for tpu_custom_call.1']
    #allocation7 [shape = 'u8[4096]{0}', space=vmem, size = 0x1000, scoped, tag = 'input window, operand 3, single buffered']
    #allocation8 [shape = 'u8[8192]{0}', space=vmem, size = 0x2000, scoped, tag = 'input window, operand 4, single buffered']
    #allocation9 [shape = 's32[1]{0}', space=sflag, size = 0x4, scoped, tag = 'scoped memory for tpu_custom_call.1']
    #allocation10 [shape = 'u8[163840]{0}', space=vmem, size = 0x28000, scoped, tag = 'output window, operand 0']
    %11 = vsyncpa [#allocation3], 0
    %12 = vsyncpa [#allocation6], 0
    %13 = vsyncpa [#allocation9], 0
    %14 = vsyncpa [#allocation4], 0
    %s15 = scalar_lea.sflag [#allocation4], 1
    %16 = vsyncpa %s15, 0
    loop: start=0, step=1, limit=4
    $region2: #{tpu_custom_call.1} parent=1 // loop_pre_header
      _
    $region3: #{tpu_custom_call.1} parent=1 // loop_header
      %s18 = sphi 0, %s22
      %p19 = scmp.ge.s32.totalorder %s18, 4
      %s25 = sphi 0, %s37
      %s26 = sphi 0, %s33
      %s27 = sphi 0, %s25
      %s28 = sphi 0, %s26
      %s29 = sphi 0, %s27
      %s30 = sphi 0, %s28
      %s38 = sphi 0, %s38
      %s40 = sphi 0, %s38
      %s41 = sphi 0, %s40
      %s55 = sphi 0, %s41
      %s59 = sphi 0, %s59
      %s61 = sphi 0, %s59
      %s62 = sphi 0, %s61
      %s76 = sphi 0, %s62
      %s80 = sphi 0, %s80
      %s82 = sphi 0, %s80
      %s83 = sphi 0, %s82
      %s97 = sphi 0, %s83
      %s101 = sphi 0, %s101
      %s103 = sphi 0, %s101
      %s104 = sphi 0, %s103
      %s118 = sphi 0, %s104
      %s122 = sphi 0, %s122
      %s124 = sphi 0, %s122
      %s125 = sphi 0, %s124
      %s139 = sphi 0, %s125
      %s143 = sphi 0, %s143
      %s145 = sphi 0, %s143
      %s146 = sphi 0, %s145
      %s160 = sphi 0, %s146
      %s166 = sphi 0, %s168
      %s169 = sphi 0, %s166
      %s170 = sphi 0, %s169
      %s186 = sphi 0, %s170
    $region4: #{tpu_custom_call.1} parent=1 // loop_header_branch
      %21 = sbr.rel (%p19) target = $region8
    $region5: #{tpu_custom_call.1} parent=1 // loop_body
      %s23 = ssub.s32 %s18, 1
      %s24 = ssub.s32 %s18, 2
      %s31 = sadd.s32 1, %s26
      %p32 = scmp.ge.s32.totalorder %s31, 1
      %s33 = scalar_select %p32, 0, %s31
      %s34 = sadd.s32 1, %s25
      %s35 = scalar_select %p32, %s34, %s25
      %p36 = scmp.ge.s32.totalorder %s35, 2
      %s37 = scalar_select %p36, 0, %s35
      %s39 = sadd.s32 %s38, 1
      %p42 = scmp.eq.s32.totalorder %s18, 1
      %p43 = scmp.ne.s32.totalorder %s38, %s40
      %p44 = scmp.eq.s32.totalorder %s18, 0
      %p45 = por %p43, %p44
      %p46 = scmp.ne.s32.totalorder %s38, %s40
      %p47 = scmp.eq.s32.totalorder %s23, 1
      %p48 = por %p46, %p47
      %p49 = scmp.ne.s32.totalorder %s40, %s41
      %p50 = scmp.eq.s32.totalorder %s23, 0
      %p51 = por %p49, %p50
      %p52 = scmp.ne.s32.totalorder %s40, %s41
      %p53 = scmp.eq.s32.totalorder %s24, 1
      %p54 = por %p52, %p53
      %p56 = scmp.ne.s32.totalorder %s41, %s55
      %p57 = scmp.eq.s32.totalorder %s24, 0
      %p58 = por %p56, %p57
      %s60 = sadd.s32 %s59, 1
      %p63 = scmp.eq.s32.totalorder %s18, 1
      %p64 = scmp.ne.s32.totalorder %s59, %s61
      %p65 = scmp.eq.s32.totalorder %s18, 0
      %p66 = por %p64, %p65
      %p67 = scmp.ne.s32.totalorder %s59, %s61
      %p68 = scmp.eq.s32.totalorder %s23, 1
      %p69 = por %p67, %p68
      %p70 = scmp.ne.s32.totalorder %s61, %s62
      %p71 = scmp.eq.s32.totalorder %s23, 0
      %p72 = por %p70, %p71
      %p73 = scmp.ne.s32.totalorder %s61, %s62
      %p74 = scmp.eq.s32.totalorder %s24, 1
      %p75 = por %p73, %p74
      %p77 = scmp.ne.s32.totalorder %s62, %s76
      %p78 = scmp.eq.s32.totalorder %s24, 0
      %p79 = por %p77, %p78
      %s81 = sadd.s32 %s80, 1
      %p84 = scmp.eq.s32.totalorder %s18, 1
      %p85 = scmp.ne.s32.totalorder %s80, %s82
      %p86 = scmp.eq.s32.totalorder %s18, 0
      %p87 = por %p85, %p86
      %p88 = scmp.ne.s32.totalorder %s80, %s82
      %p89 = scmp.eq.s32.totalorder %s23, 1
      %p90 = por %p88, %p89
      %p91 = scmp.ne.s32.totalorder %s82, %s83
      %p92 = scmp.eq.s32.totalorder %s23, 0
      %p93 = por %p91, %p92
      %p94 = scmp.ne.s32.totalorder %s82, %s83
      %p95 = scmp.eq.s32.totalorder %s24, 1
      %p96 = por %p94, %p95
      %p98 = scmp.ne.s32.totalorder %s83, %s97
      %p99 = scmp.eq.s32.totalorder %s24, 0
      %p100 = por %p98, %p99
      %s102 = sadd.s32 %s101, 1
      %p105 = scmp.eq.s32.totalorder %s18, 1
      %p106 = scmp.ne.s32.totalorder %s101, %s103
      %p107 = scmp.eq.s32.totalorder %s18, 0
      %p108 = por %p106, %p107
      %p109 = scmp.ne.s32.totalorder %s101, %s103
      %p110 = scmp.eq.s32.totalorder %s23, 1
      %p111 = por %p109, %p110
      %p112 = scmp.ne.s32.totalorder %s103, %s104
      %p113 = scmp.eq.s32.totalorder %s23, 0
      %p114 = por %p112, %p113
      %p115 = scmp.ne.s32.totalorder %s103, %s104
      %p116 = scmp.eq.s32.totalorder %s24, 1
      %p117 = por %p115, %p116
      %p119 = scmp.ne.s32.totalorder %s104, %s118
      %p120 = scmp.eq.s32.totalorder %s24, 0
      %p121 = por %p119, %p120
      %s123 = sadd.s32 %s122, 1
      %p126 = scmp.eq.s32.totalorder %s18, 1
      %p127 = scmp.ne.s32.totalorder %s122, %s124
      %p128 = scmp.eq.s32.totalorder %s18, 0
      %p129 = por %p127, %p128
      %p130 = scmp.ne.s32.totalorder %s122, %s124
      %p131 = scmp.eq.s32.totalorder %s23, 1
      %p132 = por %p130, %p131
      %p133 = scmp.ne.s32.totalorder %s124, %s125
      %p134 = scmp.eq.s32.totalorder %s23, 0
      %p135 = por %p133, %p134
      %p136 = scmp.ne.s32.totalorder %s124, %s125
      %p137 = scmp.eq.s32.totalorder %s24, 1
      %p138 = por %p136, %p137
      %p140 = scmp.ne.s32.totalorder %s125, %s139
      %p141 = scmp.eq.s32.totalorder %s24, 0
      %p142 = por %p140, %p141
      %s144 = sadd.s32 %s143, 1
      %p147 = scmp.eq.s32.totalorder %s18, 1
      %p148 = scmp.ne.s32.totalorder %s143, %s145
      %p149 = scmp.eq.s32.totalorder %s18, 0
      %p150 = por %p148, %p149
      %p151 = scmp.ne.s32.totalorder %s143, %s145
      %p152 = scmp.eq.s32.totalorder %s23, 1
      %p153 = por %p151, %p152
      %p154 = scmp.ne.s32.totalorder %s145, %s146
      %p155 = scmp.eq.s32.totalorder %s23, 0
      %p156 = por %p154, %p155
      %p157 = scmp.ne.s32.totalorder %s145, %s146
      %p158 = scmp.eq.s32.totalorder %s24, 1
      %p159 = por %p157, %p158
      %p161 = scmp.ne.s32.totalorder %s146, %s160
      %p162 = scmp.eq.s32.totalorder %s24, 0
      %p163 = por %p161, %p162
      %s164 = ssub.s32 %s25, %s37
      %p165 = scmp.eq.s32.totalorder %s164, 0
      %s167 = sadd.s32 %s166, 1
      %s168 = scalar_select %p165, %s166, %s167
      %p171 = pneg %p165
      %p172 = scmp.eq.s32.totalorder %s18, 1
      %p173 = por %p171, %p172
      %p174 = scmp.ne.s32.totalorder %s166, %s169
      %p175 = scmp.eq.s32.totalorder %s18, 0
      %p176 = por %p174, %p175
      %p177 = scmp.ne.s32.totalorder %s166, %s169
      %p178 = scmp.eq.s32.totalorder %s23, 1
      %p179 = por %p177, %p178
      %p180 = scmp.ne.s32.totalorder %s169, %s170
      %p181 = scmp.eq.s32.totalorder %s23, 0
      %p182 = por %p180, %p181
      %p183 = scmp.ne.s32.totalorder %s169, %s170
      %p184 = scmp.eq.s32.totalorder %s24, 1
      %p185 = por %p183, %p184
      %p187 = scmp.ne.s32.totalorder %s170, %s186
      %p188 = scmp.eq.s32.totalorder %s24, 0
      %p189 = por %p187, %p188
      %p190 = scmp.le.s32.totalorder 1, %s18
      %p191 = scmp.lt.s32.totalorder %s18, 3
      %p192 = pnand %p190, %p191
      %p193 = pneg %p192
      // Predicated region
      $region9: #{tpu_custom_call.1} parent=5 // pred_check
        _
      $region10: #{tpu_custom_call.1} parent=5 // pred_check_branch
        %195 = sbr.rel (%p192) target = $region12
      $region11: #{tpu_custom_call.1} parent=5 // pred_region
        %s196 = ssub.s32 %s18, 1
        // Predicated region
        $region13: #{tpu_custom_call.1} parent=11 // pred_check
          %p197 = pneg %p51
        $region14: #{tpu_custom_call.1} parent=11 // pred_check_branch
          %199 = sbr.rel (%p197) target = $region16
        $region15: #{tpu_custom_call.1} parent=11 // pred_region
          %s201 = ssub.s32 128, 128
          %202 = vsyncadd [#allocation3], %s201
          %s204 = sshll.u32 [#allocation2], 4
          %s205 = int_to_ptr.vmem [resolvable:$true] %s204
          %207 = dma.hbm_to_vmem [thread:$0]  %s0, 128, %s205, [#allocation3]
        $region16: #{tpu_custom_call.1} parent=11 // pred_fallthru
          _
        // Predicated region
        $region17: #{tpu_custom_call.1} parent=11 // pred_check
          %p208 = pneg %p72
        $region18: #{tpu_custom_call.1} parent=11 // pred_check_branch
          %210 = sbr.rel (%p208) target = $region20
        $region19: #{tpu_custom_call.1} parent=11 // pred_region
          _
        $region20: #{tpu_custom_call.1} parent=11 // pred_fallthru
          _
        // Predicated region
        $region21: #{tpu_custom_call.1} parent=11 // pred_check
          %p211 = pneg %p93
        $region22: #{tpu_custom_call.1} parent=11 // pred_check_branch
          %213 = sbr.rel (%p211) target = $region24
        $region23: #{tpu_custom_call.1} parent=11 // pred_region
          %s215 = ssub.s32 128, 128
          %216 = vsyncadd [#allocation6], %s215
          %s218 = sshll.u32 [#allocation5], 4
          %s219 = int_to_ptr.vmem [resolvable:$true] %s218
          %221 = dma.hbm_to_vmem [thread:$0]  %s2, 128, %s219, [#allocation6]
        $region24: #{tpu_custom_call.1} parent=11 // pred_fallthru
          _
        // Predicated region
        $region25: #{tpu_custom_call.1} parent=11 // pred_check
          %p222 = pneg %p114
        $region26: #{tpu_custom_call.1} parent=11 // pred_check_branch
          %224 = sbr.rel (%p222) target = $region28
        $region27: #{tpu_custom_call.1} parent=11 // pred_region
          %s226 = ssub.s32 128, 128
          %227 = vsyncadd [#allocation6], %s226
          %s229 = sshll.u32 [#allocation7], 4
          %s230 = int_to_ptr.vmem [resolvable:$true] %s229
          %232 = dma.hbm_to_vmem [thread:$0]  %s3, 128, %s230, [#allocation6]
        $region28: #{tpu_custom_call.1} parent=11 // pred_fallthru
          _
        // Predicated region
        $region29: #{tpu_custom_call.1} parent=11 // pred_check
          %p233 = pneg %p135
        $region30: #{tpu_custom_call.1} parent=11 // pred_check_branch
          %235 = sbr.rel (%p233) target = $region32
        $region31: #{tpu_custom_call.1} parent=11 // pred_region
          %s237 = ssub.s32 256, 256
          %238 = vsyncadd [#allocation9], %s237
          %s239 = sshll.u32 [#allocation8], 4
          %s240 = int_to_ptr.vmem [resolvable:$true] %s239
          %245 = dma.hbm_to_vmem [thread:$0]  %s4, 256, %s240, [#allocation9], 128, 128, 8
        $region32: #{tpu_custom_call.1} parent=11 // pred_fallthru
          _
        // Predicated region
        $region33: #{tpu_custom_call.1} parent=11 // pred_check
          %p246 = pneg %p156
        $region34: #{tpu_custom_call.1} parent=11 // pred_check_branch
          %248 = sbr.rel (%p246) target = $region36
        $region35: #{tpu_custom_call.1} parent=11 // pred_region
          _
        $region36: #{tpu_custom_call.1} parent=11 // pred_fallthru
          _
      $region12: #{tpu_custom_call.1} parent=5 // pred_fallthru
        _
      %p249 = scmp.lt.s32.totalorder %s18, 2
      // Predicated region
      $region37: #{tpu_custom_call.1} parent=5 // pred_check
        %p250 = pneg %p249
      $region38: #{tpu_custom_call.1} parent=5 // pred_check_branch
        %252 = sbr.rel (%p250) target = $region40
      $region39: #{tpu_custom_call.1} parent=5 // pred_region
        _
      $region40: #{tpu_custom_call.1} parent=5 // pred_fallthru
        _
      %p253 = scmp.le.s32.totalorder 1, %s18
      %p254 = scmp.lt.s32.totalorder %s18, 3
      %p255 = pnand %p253, %p254
      %p256 = pneg %p255
      // Predicated region
      $region41: #{tpu_custom_call.1} parent=5 // pred_check
        _
      $region42: #{tpu_custom_call.1} parent=5 // pred_check_branch
        %258 = sbr.rel (%p255) target = $region44
      $region43: #{tpu_custom_call.1} parent=5 // pred_region
        %s259 = ssub.s32 %s18, 1
        // Predicated region
        $region45: #{tpu_custom_call.1} parent=43 // pred_check
          %p260 = pneg %p51
        $region46: #{tpu_custom_call.1} parent=43 // pred_check_branch
          %262 = sbr.rel (%p260) target = $region48
        $region47: #{tpu_custom_call.1} parent=43 // pred_region
          %263 = dma.done [#allocation3], 128
        $region48: #{tpu_custom_call.1} parent=43 // pred_fallthru
          _
        // Predicated region
        $region49: #{tpu_custom_call.1} parent=43 // pred_check
          %p264 = pneg %p93
        $region50: #{tpu_custom_call.1} parent=43 // pred_check_branch
          %266 = sbr.rel (%p264) target = $region52
        $region51: #{tpu_custom_call.1} parent=43 // pred_region
          %267 = dma.done [#allocation6], 128
        $region52: #{tpu_custom_call.1} parent=43 // pred_fallthru
          _
        // Predicated region
        $region53: #{tpu_custom_call.1} parent=43 // pred_check
          %p268 = pneg %p114
        $region54: #{tpu_custom_call.1} parent=43 // pred_check_branch
          %270 = sbr.rel (%p268) target = $region56
        $region55: #{tpu_custom_call.1} parent=43 // pred_region
          %271 = dma.done [#allocation6], 128
        $region56: #{tpu_custom_call.1} parent=43 // pred_fallthru
          _
        // Predicated region
        $region57: #{tpu_custom_call.1} parent=43 // pred_check
          %p272 = pneg %p135
        $region58: #{tpu_custom_call.1} parent=43 // pred_check_branch
          %274 = sbr.rel (%p272) target = $region60
        $region59: #{tpu_custom_call.1} parent=43 // pred_region
          %275 = dma.done [#allocation9], 256
        $region60: #{tpu_custom_call.1} parent=43 // pred_fallthru
          _
        %p276 = pneg %p51
        %p277 = pneg %p48
        %p278 = pneg %p72
        %p279 = pneg %p69
        %p280 = pneg %p93
        %p281 = pneg %p90
        %p282 = pneg %p114
        %p283 = pneg %p111
        %p284 = pneg %p135
        %p285 = pneg %p132
        %p286 = pneg %p156
        %p287 = pneg %p153
        %p288 = pneg %p182
        %p289 = pneg %p179
        %s290 = sand.u32 %s169, 1
        %s291 = scalar_lea.sflag [#allocation4], %s290
        %s292 = sand.u32 %s169, 1
        %s293 = smul.addr %s292, 160
        %s294 = scalar_lea.vmem [#allocation10], %s293
        %s295 = sadd.s32 %s27, %s28
        %p296 = scmp.eq.s32.totalorder %s28, 0
        // Predicated region
        $region61: #{tpu_custom_call.1} parent=43 // pred_check
          %p297 = pneg %p296
        $region62: #{tpu_custom_call.1} parent=43 // pred_check_branch
          %299 = sbr.rel (%p297) target = $region64
        $region63: #{tpu_custom_call.1} parent=43 // pred_region
          %300 = vst [vmem:[%s294] sm:$0xff] 0.0
          %301 = vst [vmem:[%s294 + $0x8] sm:$0xff] 0.0
          %302 = vst [vmem:[%s294 + $0x10] sm:$0xff] 0.0
          %303 = vst [vmem:[%s294 + $0x18] sm:$0xff] 0.0
          %304 = vst [vmem:[%s294 + $0x20] sm:$0xff] 0.0
          %305 = vst [vmem:[%s294 + $0x28] sm:$0xff] 0.0
          %306 = vst [vmem:[%s294 + $0x30] sm:$0xff] 0.0
          %307 = vst [vmem:[%s294 + $0x38] sm:$0xff] 0.0
          %308 = vst [vmem:[%s294 + $0x40] sm:$0xff] 0.0
          %309 = vst [vmem:[%s294 + $0x48] sm:$0xff] 0.0
          %310 = vst [vmem:[%s294 + $0x50] sm:$0xff] 0.0
          %311 = vst [vmem:[%s294 + $0x58] sm:$0xff] 0.0
          %312 = vst [vmem:[%s294 + $0x60] sm:$0xff] 0.0
          %313 = vst [vmem:[%s294 + $0x68] sm:$0xff] 0.0
          %314 = vst [vmem:[%s294 + $0x70] sm:$0xff] 0.0
          %315 = vst [vmem:[%s294 + $0x78] sm:$0xff] 0.0
          %316 = vst [vmem:[%s294 + $0x80] sm:$0xff] 0.0
          %317 = vst [vmem:[%s294 + $0x88] sm:$0xff] 0.0
          %318 = vst [vmem:[%s294 + $0x90] sm:$0xff] 0.0
          %319 = vst [vmem:[%s294 + $0x98] sm:$0xff] 0.0
        $region64: #{tpu_custom_call.1} parent=43 // pred_fallthru
          _
        %p320 = scmp.lt.s32.totalorder %s295, 1
        // Predicated region
        $region65: #{tpu_custom_call.1} parent=43 // pred_check
          %p321 = pneg %p320
        $region66: #{tpu_custom_call.1} parent=43 // pred_check_branch
          %323 = sbr.rel (%p321) target = $region68
        $region67: #{tpu_custom_call.1} parent=43 // pred_region
          %v324 = vld [vmem:[#allocation2] sm:$0xff]
          %v325 = vlog2.pop %v324
          %v326 = vmul.f32 %v325, 0.6931472
          %v327 = vld [vmem:[%s294] sm:$0xff]
          %v328 = vadd.f32 %v326, 0.0
          %v329 = vadd.f32 %v327, %v328
          %330 = vst [vmem:[%s294] sm:$0xff] %v329
          %v331 = vld [vmem:[%s1] sm:$0x1]
          %v332 = vlog2.pop %v331
          %v333 = vmul.f32 %v332, 0.6931472
          %s334 = scalar_lea.vmem %s294, 32 [#allocation10]
          %v335 = vld [vmem:[%s334] sm:$0x1]
          %v336 = vadd.f32 %v333, 0.0
          %v337 = vadd.f32 %v335, %v336
          %338 = vst [vmem:[%s334] sm:$0x1] %v337
          %v339 = vld [vmem:[#allocation5] sm:$0xff]
          %v340 = vld [vmem:[#allocation7] sm:$0xff]
          %v341 = vlog2.pop %v339
          %v342 = vmul.f32 %v341, 0.6931472
          %s343 = scalar_lea.vmem %s294, 64 [#allocation10]
          %v344 = vld [vmem:[%s343] sm:$0xff]
          %v345 = vadd.f32 %v342, 0.0
          %v346 = vadd.f32 %v344, %v345
          %347 = vst [vmem:[%s343] sm:$0xff] %v346
          %v348 = vlog2.pop %v340
          %v349 = vmul.f32 %v348, 0.6931472
          %v350 = vmul.f32 %v339, %v349
          %s351 = scalar_lea.vmem %s294, 96 [#allocation10]
          %v352 = vld [vmem:[%s351] sm:$0xff]
          %v353 = vadd.f32 %v350, 0.0
          %v354 = vadd.f32 %v352, %v353
          %355 = vst [vmem:[%s351] sm:$0xff] %v354
          %v356 = vld [vmem:[#allocation8] sm:$0xff]
          %v357 = vld [vmem:[#allocation8 + $0x8] sm:$0xf]
          %v358 = vld [vmem:[%s5] sm:$0xff]
          %v359 = vld [vmem:[%s5 + $0x8] sm:$0xf]
          %v360 = vsub.f32 %v356, %v358
          %v361 = vsub.f32 %v357, %v359
          %v362 = vmul.f32 %v360, %v360
          %v363 = vmul.f32 %v361, %v361
          %s364 = scalar_lea.vmem %s294, 128 [#allocation10]
          %v365 = vld [vmem:[%s364] sm:$0x1]
          %vm366 = vcmask 1043456
          %v367 = vsel %vm366, %v363, 0.0
          %v368 = vadd.f32 %v362, %v367
          %v369 = vrot.slane %v368, 4
          %v370 = vadd.f32 %v368, %v369
          %v371 = vrot.slane %v370, 2
          %v372 = vadd.f32 %v370, %v371
          %v373 = vrot.slane %v372, 1
          %v374 = vadd.f32 %v372, %v373
          %v375 = vadd.f32 %v365, %v374
          %376 = vst [vmem:[%s364] sm:$0x1] %v375
        $region68: #{tpu_custom_call.1} parent=43 // pred_fallthru
          _
        %s377 = sand.u32 %s169, 1
        %s378 = scalar_lea.sflag [#allocation4], %s377
        %s379 = sand.u32 %s169, 1
        %s380 = smul.addr %s379, 160
        %s381 = scalar_lea.vmem [#allocation10], %s380
        // Predicated region
        $region69: #{tpu_custom_call.1} parent=43 // pred_check
          %p382 = pneg %p179
        $region70: #{tpu_custom_call.1} parent=43 // pred_check_branch
          %384 = sbr.rel (%p382) target = $region72
        $region71: #{tpu_custom_call.1} parent=43 // pred_region
          %s386 = ssub.s32 2560, 2560
          %387 = vsyncadd %s378, %s386
          %s388 = smul.addr %s27, 20
          %s389 = smul.addr %s388, 128
          %s390 = scalar_lea.hbm %s6, %s389
          %s391 = sshll.u32 %s381, 4
          %s392 = int_to_ptr.vmem [resolvable:$true] %s391
          %397 = dma.vmem_to_hbm [thread:$0]  %s392, 2560, %s390, %s378, 128, 128, 8
        $region72: #{tpu_custom_call.1} parent=43 // pred_fallthru
          _
      $region44: #{tpu_custom_call.1} parent=5 // pred_fallthru
        _
      %p398 = scmp.le.s32.totalorder 2, %s18
      // Predicated region
      $region73: #{tpu_custom_call.1} parent=5 // pred_check
        %p399 = pneg %p398
      $region74: #{tpu_custom_call.1} parent=5 // pred_check_branch
        %401 = sbr.rel (%p399) target = $region76
      $region75: #{tpu_custom_call.1} parent=5 // pred_region
        %s402 = ssub.s32 %s18, 2
        // Predicated region
        $region77: #{tpu_custom_call.1} parent=75 // pred_check
          %p403 = pneg %p185
        $region78: #{tpu_custom_call.1} parent=75 // pred_check_branch
          %405 = sbr.rel (%p403) target = $region80
        $region79: #{tpu_custom_call.1} parent=75 // pred_region
          %s406 = sand.u32 %s170, 1
          %s407 = scalar_lea.sflag [#allocation4], %s406
          %s408 = sand.u32 %s170, 1
          %s409 = smul.addr %s408, 160
          %s410 = scalar_lea.vmem [#allocation10], %s409
          %411 = dma.done %s407, 2560
        $region80: #{tpu_custom_call.1} parent=75 // pred_fallthru
          _
      $region76: #{tpu_custom_call.1} parent=5 // pred_fallthru
        _
    $region6: #{tpu_custom_call.1} parent=1 // loop_footer
      %s22 = sadd.s32 1, %s18
    $region7: #{tpu_custom_call.1} parent=1 // loop_footer_branch
      %17 = sbr.rel target = $region3
    $region8: #{tpu_custom_call.1} parent=1 // loop_exit
      _
    %412 = vsyncpa [#allocation3], 1
    %s413 = scalar_lea.sflag [#allocation3], 1
    %414 = vsyncpa %s413, 1
    %415 = vsyncpa [#allocation6], 1
    %416 = vsyncpa [#allocation9], 1
    %417 = vsyncpa [#allocation4], 1
    %s418 = scalar_lea.sflag [#allocation4], 1
    %419 = vsyncpa %s418, 1

</llo_original>
